<compile_context>
chip_gen: v7x
topology: tpu7x:2x2x1
jax: 0.10.0
libtpu: 0.0.40
codegen_flags: <defaults>
</compile_context>

<pallas_src>
import jax
import jax.numpy as jnp
from jax.experimental import pallas as pl
from jax.experimental.pallas import tpu as pltpu

LANE = 128
SUBLANE = 8


def _num_tensorcores():
    """Best-effort TensorCores-per-chip query; falls back to 1 (always safe)."""
    try:
        info = pltpu.get_tpu_info()
    except Exception:
        return 1
    for name in ("num_cores", "core_count", "num_cores_per_chip",
                 "cores_per_chip", "num_tensorcores", "tensorcore_count"):
        val = getattr(info, name, None)
        if val is None:
            continue
        try:
            n = int(val)
        except (TypeError, ValueError):
            continue
        if n >= 1:
            return n
    return 1


def _make_wdist_kernel(bulk_rows, tile_rows, tiles_per_core, core_split,
                       needs_mask, binary_target):
    """Accumulate sum((2t-1)*x) over this core's tiles into a resident
    (8,128) f32 output block."""

    def kernel(x_ref, t_ref, o_ref):
        if core_split:
            tile = pl.program_id(1)
            global_tile = pl.program_id(0) * tiles_per_core + tile
        else:
            tile = pl.program_id(0)
            global_tile = tile

        @pl.when(tile == 0)
        def _():
            o_ref[...] = jnp.zeros_like(o_ref)

        x = x_ref[...].astype(jnp.float32)
        if binary_target:
            # Target is documented 0/1 (bool/int): where(t!=0, x, -x) is exact
            # and skips the target cast + mul + sub (VALU headroom for bf16
            # streaming on v7x).
            contrib = jnp.where(t_ref[...] != 0, x, -x)
        else:
            contrib = (2.0 * t_ref[...].astype(jnp.float32) - 1.0) * x

        def accumulate(c):
            # Tile-aligned (layout-preserving) reshape + VPU-only axis-0 sum
            # down to one (8,128) vreg; no in-kernel cross-lane reduce.
            partial = c.reshape(tile_rows // SUBLANE, SUBLANE, LANE).sum(axis=0)
            o_ref[...] += partial[None, :, :]

        if needs_mask:
            # Valid rows in this tile (scalar-unit arithmetic).  NOTE: int32,
            # overflows only past ~2**31 rows (~2.7e11 elements).
            rows_valid = bulk_rows - global_tile * tile_rows

            @pl.when(rows_valid >= tile_rows)     # full tile: no mask cost
            def _():
                accumulate(contrib)

            @pl.when(rows_valid < tile_rows)      # partial / overshoot tile
            def _():
                row = jax.lax.broadcasted_iota(jnp.int32, (tile_rows, LANE), 0)
                accumulate(jnp.where(row < rows_valid, contrib, 0.0))
        else:
            accumulate(contrib)

    return kernel


def wasserstein_distance_loss(inp, target, *, tile_rows=2048):
    """Pallas TPU implementation of -mean((2*target - 1) * input)."""
    assert inp.shape == target.shape, "input/target shape mismatch"
    n_elems = int(inp.size)
    if n_elems == 0:
        return jnp.float32(jnp.nan)   # matches torch .mean() of empty tensor

    flat_x = jnp.ravel(inp)
    flat_t = jnp.ravel(target)

    # 0/1 (bool / integer) targets can use the cheaper where(t!=0, x, -x) path.
    binary_target = (flat_t.dtype == jnp.bool_
                     or jnp.issubdtype(flat_t.dtype, jnp.integer))
    if flat_t.dtype == jnp.bool_:
        flat_t = flat_t.astype(jnp.int8)   # keep it narrow in HBM

    # Lane-dense bulk: full rows of 128 lanes; the <128-element remainder is
    # summed with plain jnp below (no jnp.pad double-copy of both inputs).
    bulk_rows = n_elems // LANE
    bulk_elems = bulk_rows * LANE

    def tail_sum():
        if bulk_elems == n_elems:
            return jnp.float32(0.0)
        xt = flat_x[bulk_elems:].astype(jnp.float32)
        tt = flat_t[bulk_elems:].astype(jnp.float32)
        return jnp.sum((2.0 * tt - 1.0) * xt)

    # Tiny / awkwardly-shaped inputs: not worth a kernel launch.
    if bulk_rows < SUBLANE or (bulk_rows < 32 and bulk_rows % SUBLANE != 0):
        xf = flat_x.astype(jnp.float32)
        tf = flat_t.astype(jnp.float32)
        return -jnp.mean((2.0 * tf - 1.0) * xf)

    # ---- tile sizing --------------------------------------------------------
    req = max(32, (int(tile_rows) // 32) * 32)   # multiple of 32 sublanes
    if bulk_rows <= req:
        if bulk_rows % SUBLANE == 0:
            tile_rows = bulk_rows                # one block == full array extent
        else:
            tile_rows = (bulk_rows // 32) * 32   # >= 32 here; last tile partial
    else:
        tile_rows = req
    num_tiles = pl.cdiv(bulk_rows, tile_rows)
    needs_mask_base = (bulk_rows % tile_rows) != 0

    # Narrow (int8) targets want >=32-row blocks; the tiny non-conforming case
    # falls back to an exact f32 target (trivially small cast).
    if binary_target and (tile_rows % 32) != 0:
        flat_t = flat_t.astype(jnp.float32)
        binary_target = False

    # ---- 2-D views (zero extra copies when n_elems % 128 == 0) --------------
    if bulk_elems == n_elems:
        x_bulk, t_bulk = flat_x, flat_t
    else:
        # One bulk-sized device copy per input only when n % 128 != 0 (still
        # cheaper than padding both inputs; the tail never enters the kernel).
        x_bulk, t_bulk = flat_x[:bulk_elems], flat_t[:bulk_elems]
    x2d = x_bulk.reshape(bulk_rows, LANE)
    t2d = t_bulk.reshape(bulk_rows, LANE)

    # ---- generation-aware TensorCore split (v7x / megacore only) ------------
    num_cores = max(1, min(_num_tensorcores(), num_tiles))
    core_split = num_cores >= 2 and num_tiles >= 2
    tiles_per_core = pl.cdiv(num_tiles, num_cores) if core_split else num_tiles

    def run(split):
        if split:
            grid = (num_cores, tiles_per_core)
            in_map = lambda c, i: (jnp.minimum(c * tiles_per_core + i,
                                               num_tiles - 1), 0)
            out_map = lambda c, i: (c, 0, 0)
            out_rows = num_cores
            dims = (pltpu.CORE_PARALLEL, pltpu.ARBITRARY)
            grid_tiles = num_cores * tiles_per_core
            needs_mask = needs_mask_base or (grid_tiles != num_tiles)
        else:
            grid = (num_tiles,)
            in_map = lambda i: (i, 0)
            out_map = lambda i: (0, 0, 0)
            out_rows = 1
            dims = ("arbitrary",)
            grid_tiles = num_tiles
            needs_mask = needs_mask_base
        # Double-count guard: any tile not fully covered by real rows (partial
        # boundary tile or clamped overshoot tile) must go through the mask.
        assert needs_mask or (grid_tiles * tile_rows == bulk_rows)

        kernel = _make_wdist_kernel(bulk_rows, tile_rows, tiles_per_core,
                                    split, needs_mask, binary_target)
        return pl.pallas_call(
            kernel,
            out_shape=jax.ShapeDtypeStruct((out_rows, SUBLANE, LANE),
                                           jnp.float32),
            grid_spec=pltpu.PrefetchScalarGridSpec(
                num_scalar_prefetch=0,
                grid=grid,
                in_specs=[pl.BlockSpec((tile_rows, LANE), in_map),
                          pl.BlockSpec((tile_rows, LANE), in_map)],
                out_specs=pl.BlockSpec((1, SUBLANE, LANE), out_map),
            ),
            compiler_params=pltpu.CompilerParams(dimension_semantics=dims),
        )(x2d, t2d)

    if core_split:
        try:
            partials = run(True)
        except Exception:
            # CORE_PARALLEL not supported in this configuration: fall back to
            # the (always correct) serial grid on one TensorCore.
            partials = run(False)
    else:
        partials = run(False)

    # One tiny final cross-lane reduce + exact-integer mean + negate.
    total = jnp.sum(partials) + tail_sum()
    return -(total / n_elems)


class WDistLoss:
    """Wasserstein distance loss (target should have values 0 or 1)."""

    def __call__(self, inp, target):
        return wasserstein_distance_loss(inp, target)


if __name__ == "__main__":
    key = jax.random.PRNGKey(0)
    k1, k2, k3, k4 = jax.random.split(key, 4)

    loss_mod = WDistLoss()

    # Test 1: small NCHW-like critic scores vs. 0/1 labels (single-block path).
    x = jax.random.normal(k1, (2, 4, 16, 16), dtype=jnp.float32)
    t = jax.random.bernoulli(k2, 0.5, (2, 4, 16, 16)).astype(jnp.float32)
    loss = loss_mod(x, t)
    jax.block_until_ready(loss)
    ref = -jnp.mean((2.0 * t - 1.0) * x)
    assert jnp.allclose(loss, ref, atol=1e-5, rtol=1e-5), (loss, ref)

    # Test 2: shape whose row count is not a multiple of the tile -> exercises
    # the multi-tile reduction and the @pl.when-gated partial-tile mask.
    x2 = jax.random.normal(k3, (2, 4, 40, 40), dtype=jnp.float32)
    t2 = jax.random.bernoulli(k4, 0.5, (2, 4, 40, 40)).astype(jnp.float32)
    loss2 = wasserstein_distance_loss(x2, t2, tile_rows=64)
    jax.block_until_ready(loss2)
    ref2 = -jnp.mean((2.0 * t2 - 1.0) * x2)
    assert jnp.allclose(loss2, ref2, atol=1e-5, rtol=1e-5), (loss2, ref2)

    print("KERNEL_OK")
</pallas_src>

<mosaic_0001>
module attributes {stable_mosaic.version = 11 : i64} {
  func.func @kernel(%arg0: i32, %arg1: memref<16x128xf32, #tpu.memory_space<vmem>>, %arg2: memref<16x128xf32, #tpu.memory_space<vmem>>, %arg3: memref<1x8x128xf32, #tpu.memory_space<vmem>>) attributes {dimension_semantics = [#tpu.dimension_semantics<arbitrary>], iteration_bounds = array<i64: 1>, scalar_prefetch = 0 : i64, scratch_operands = 0 : i64, tpu.core_type = #tpu.core_type<tc>, window_params = [{transform_indices = @transform_0, window_bounds = array<i64: 16, 128>}, {transform_indices = @transform_1, window_bounds = array<i64: 16, 128>}, {pipeline_mode = #tpu.pipeline_mode<synchronous>, transform_indices = @transform_2, window_bounds = array<i64: 1, 8, 128>}]} {
    %c0_i32 = arith.constant 0 : i32
    %0 = arith.cmpi eq, %arg0, %c0_i32 : i32
    %1 = arith.extui %0 : i1 to i32
    %c0_i32_0 = arith.constant 0 : i32
    %2 = arith.cmpi ne, %1, %c0_i32_0 : i32
    scf.if %2 {
      %cst_12 = arith.constant 0.000000e+00 : f32
      %16 = vector.broadcast %cst_12 : f32 to vector<1x8x128xf32>
      %c0_13 = arith.constant 0 : index
      %c0_14 = arith.constant 0 : index
      %c0_15 = arith.constant 0 : index
      %17 = vector.load %arg3[%c0_13, %c0_14, %c0_15] : memref<1x8x128xf32, #tpu.memory_space<vmem>>, vector<1x8x128xf32>
      tpu.vector_store %arg3[%c0_13, %c0_14, %c0_15], %16 {strides = array<i32>} : memref<1x8x128xf32, #tpu.memory_space<vmem>>, vector<1x8x128xf32>,
    } else {
    }
    %c0 = arith.constant 0 : index
    %c0_1 = arith.constant 0 : index
    %3 = vector.load %arg1[%c0, %c0_1] : memref<16x128xf32, #tpu.memory_space<vmem>>, vector<16x128xf32>
    %c0_2 = arith.constant 0 : index
    %c0_3 = arith.constant 0 : index
    %4 = vector.load %arg2[%c0_2, %c0_3] : memref<16x128xf32, #tpu.memory_space<vmem>>, vector<16x128xf32>
    %cst = arith.constant 2.000000e+00 : f32
    %5 = vector.broadcast %cst : f32 to vector<16x128xf32>
    %6 = arith.mulf %5, %4 : vector<16x128xf32>
    %cst_4 = arith.constant 1.000000e+00 : f32
    %7 = vector.broadcast %cst_4 : f32 to vector<16x128xf32>
    %8 = arith.subf %6, %7 : vector<16x128xf32>
    %9 = arith.mulf %8, %3 : vector<16x128xf32>
    %10 = vector.shape_cast %9 : vector<16x128xf32> to vector<2x8x128xf32>
    %cst_5 = arith.constant dense<0.000000e+00> : vector<8x128xf32>
    %11 = vector.multi_reduction <add>, %10, %cst_5 [0] : vector<2x8x128xf32> to vector<8x128xf32>
    %c0_6 = arith.constant 0 : index
    %c0_7 = arith.constant 0 : index
    %c0_8 = arith.constant 0 : index
    %12 = vector.load %arg3[%c0_6, %c0_7, %c0_8] : memref<1x8x128xf32, #tpu.memory_space<vmem>>, vector<1x8x128xf32>
    %13 = vector.shape_cast %11 : vector<8x128xf32> to vector<1x8x128xf32>
    %14 = arith.addf %12, %13 : vector<1x8x128xf32>
    %c0_9 = arith.constant 0 : index
    %c0_10 = arith.constant 0 : index
    %c0_11 = arith.constant 0 : index
    %15 = vector.load %arg3[%c0_9, %c0_10, %c0_11] : memref<1x8x128xf32, #tpu.memory_space<vmem>>, vector<1x8x128xf32>
    tpu.vector_store %arg3[%c0_9, %c0_10, %c0_11], %14 {strides = array<i32>} : memref<1x8x128xf32, #tpu.memory_space<vmem>>, vector<1x8x128xf32>,
    return
  }
  func.func @transform_0(%arg0: i32) -> (i32, i32) {
    %c0_i32 = arith.constant 0 : i32
    %c0_i32_0 = arith.constant 0 : i32
    return %arg0, %c0_i32 : i32, i32
  }
  func.func @transform_1(%arg0: i32) -> (i32, i32) {
    %c0_i32 = arith.constant 0 : i32
    %c0_i32_0 = arith.constant 0 : i32
    return %arg0, %c0_i32 : i32, i32
  }
  func.func @transform_2(%arg0: i32) -> (i32, i32, i32) {
    %c0_i32 = arith.constant 0 : i32
    %c0_i32_0 = arith.constant 0 : i32
    %c0_i32_1 = arith.constant 0 : i32
    %c0_i32_2 = arith.constant 0 : i32
    return %c0_i32, %c0_i32_0, %c0_i32_1 : i32, i32, i32
  }
}

</mosaic_0001>

<llo_original>
// kernel: tpu_custom_call.1
$region0: #{tpu_custom_call.1}
  #allocation0 [shape = 'u32[]', space=smem, size = 0x4, offset = 0x4, fixed_abs, tag = 'smem constant byte address 0x4 - core index']
  #allocation1 [shape = 'u32[144,128]{1,0:T(1,128)}', space=vmem, size = 0x12000, scoped, tag = 'internal scratch']
  %s0 = inlined_call_operand.hbm [shape: f32[16,128], index: 0, kind: input, shape index: {}]
  %s1 = inlined_call_operand.hbm [shape: f32[16,128], index: 1, kind: input, shape index: {}]
  %s2 = inlined_call_operand.hbm [shape: f32[1,8,128], index: 2, kind: output, shape index: {}]
  %s3 = sld [smem:[#allocation0]]
  $region30: #{tpu_custom_call.1} parent=0
    _
  %s5 = ssub.s32 1, %s3
  %s6 = scalar_select 0, %s5, %s3
  $region1: #{tpu_custom_call.1} parent=0
    #allocation2 [shape = 'u8[8192]{0}', space=vmem, size = 0x2000, scoped, tag = 'input window, operand 0, single buffered']
    #allocation3 [shape = 's32[1]{0}', space=sflag, size = 0x4, scoped, tag = 'scoped memory for tpu_custom_call.1']
    #allocation4 [shape = 's32[1]{0}', space=sflag, size = 0x4, scoped, tag = 'scoped memory for tpu_custom_call.1']
    #allocation5 [shape = 'u8[8192]{0}', space=vmem, size = 0x2000, scoped, tag = 'input window, operand 1, single buffered']
    #allocation6 [shape = 's32[1]{0}', space=sflag, size = 0x4, scoped, tag = 'scoped memory for tpu_custom_call.1']
    #allocation7 [shape = 'u8[4096]{0}', space=vmem, size = 0x1000, scoped, tag = 'output window, operand 0, single buffered']
    %7 = vsyncpa [#allocation3], 0
    %8 = vsyncpa [#allocation6], 0
    %9 = vsyncpa [#allocation4], 0
    // Predicated region
    $region2: #{tpu_custom_call.1} parent=1 // pred_check
      _
    $region3: #{tpu_custom_call.1} parent=1 // pred_check_branch
      %11 = sbr.rel (0) target = $region5
    $region4: #{tpu_custom_call.1} parent=1 // pred_region
      %s13 = ssub.s32 256, 256
      %14 = vsyncadd [#allocation3], %s13
      %s15 = sshll.u32 [#allocation2], 4
      %s16 = int_to_ptr.vmem [resolvable:$true] %s15
      %21 = dma.hbm_to_vmem [thread:$0]  %s0, 256, %s16, [#allocation3], 128, 128, 8
    $region5: #{tpu_custom_call.1} parent=1 // pred_fallthru
      _
    // Predicated region
    $region6: #{tpu_custom_call.1} parent=1 // pred_check
      _
    $region7: #{tpu_custom_call.1} parent=1 // pred_check_branch
      %23 = sbr.rel (0) target = $region9
    $region8: #{tpu_custom_call.1} parent=1 // pred_region
      %s25 = ssub.s32 256, 256
      %26 = vsyncadd [#allocation6], %s25
      %s27 = sshll.u32 [#allocation5], 4
      %s28 = int_to_ptr.vmem [resolvable:$true] %s27
      %33 = dma.hbm_to_vmem [thread:$0]  %s1, 256, %s28, [#allocation6], 128, 128, 8
    $region9: #{tpu_custom_call.1} parent=1 // pred_fallthru
      _
    // Predicated region
    $region10: #{tpu_custom_call.1} parent=1 // pred_check
      _
    $region11: #{tpu_custom_call.1} parent=1 // pred_check_branch
      %35 = sbr.rel (0) target = $region13
    $region12: #{tpu_custom_call.1} parent=1 // pred_region
      %36 = dma.done [#allocation3], 256
    $region13: #{tpu_custom_call.1} parent=1 // pred_fallthru
      _
    // Predicated region
    $region14: #{tpu_custom_call.1} parent=1 // pred_check
      _
    $region15: #{tpu_custom_call.1} parent=1 // pred_check_branch
      %38 = sbr.rel (0) target = $region17
    $region16: #{tpu_custom_call.1} parent=1 // pred_region
      %39 = dma.done [#allocation6], 256
    $region17: #{tpu_custom_call.1} parent=1 // pred_fallthru
      _
    %p40 = scmp.eq.s32.totalorder 0, 0
    // Predicated region
    $region18: #{tpu_custom_call.1} parent=1 // pred_check
      %p41 = pneg %p40
    $region19: #{tpu_custom_call.1} parent=1 // pred_check_branch
      %43 = sbr.rel (%p41) target = $region21
    $region20: #{tpu_custom_call.1} parent=1 // pred_region
      %44 = vst [vmem:[#allocation7] sm:$0xff] 0.0
    $region21: #{tpu_custom_call.1} parent=1 // pred_fallthru
      _
    %v45 = vld [vmem:[#allocation2] sm:$0xff]
    %v46 = vld [vmem:[#allocation2 + $0x8] sm:$0xff]
    %v47 = vld [vmem:[#allocation5] sm:$0xff]
    %v48 = vld [vmem:[#allocation5 + $0x8] sm:$0xff]
    %v49 = vmul.f32 %v47, 2.0
    %v50 = vmul.f32 %v48, 2.0
    %v51 = vsub.f32 %v49, 1.0
    %v52 = vsub.f32 %v50, 1.0
    %v53 = vmul.f32 %v51, %v45
    %v54 = vmul.f32 %v52, %v46
    %v55 = vadd.f32 %v53, %v54
    %v56 = vld [vmem:[#allocation7] sm:$0xff]
    %v57 = vadd.f32 %v56, %v55
    %58 = vst [vmem:[#allocation7] sm:$0xff] %v57
    // Predicated region
    $region22: #{tpu_custom_call.1} parent=1 // pred_check
      _
    $region23: #{tpu_custom_call.1} parent=1 // pred_check_branch
      %60 = sbr.rel (0) target = $region25
    $region24: #{tpu_custom_call.1} parent=1 // pred_region
      %s62 = ssub.s32 128, 128
      %63 = vsyncadd [#allocation4], %s62
      %s65 = sshll.u32 [#allocation7], 4
      %s66 = int_to_ptr.vmem [resolvable:$true] %s65
      %68 = dma.vmem_to_hbm [thread:$0]  %s66, 128, %s2, [#allocation4]
    $region25: #{tpu_custom_call.1} parent=1 // pred_fallthru
      _
    // Predicated region
    $region26: #{tpu_custom_call.1} parent=1 // pred_check
      _
    $region27: #{tpu_custom_call.1} parent=1 // pred_check_branch
      %70 = sbr.rel (0) target = $region29
    $region28: #{tpu_custom_call.1} parent=1 // pred_region
      %71 = dma.done [#allocation4], 128
    $region29: #{tpu_custom_call.1} parent=1 // pred_fallthru
      _
    %72 = vsyncpa [#allocation3], 1
    %73 = vsyncpa [#allocation6], 1
    %74 = vsyncpa [#allocation4], 1

</llo_original>
